<compile_context>
chip_gen: v5e
topology: v5e:2x2
jax: 0.10.0
libtpu: 0.0.40
codegen_flags: <defaults>
</compile_context>

<pallas_src>
import math
from functools import partial

import numpy as np
import jax
import jax.numpy as jnp
from jax import lax
from jax.experimental import pallas as pl
from jax.experimental.pallas import tpu as pltpu


def _phase_taps(stride, dil, K, pad_before):
    """Per output phase: list of (kernel index k, compact-input row/col offset).

    conv_transpose relation: out[o] += x[i] * w[k]  with  o = i*stride + k*dil - pad.
    For o = b*stride + ph, tap k contributes iff (ph + pad - k*dil) % stride == 0,
    and then i = b + (ph + pad - k*dil) // stride.
    """
    taps = []
    for ph in range(stride):
        lst = []
        for k in range(K):
            t = ph + pad_before - k * dil
            if t % stride == 0:
                lst.append((k, t // stride))
        taps.append(lst)
    return taps


def _deconv_phase_kernel(x_ref, w_ref, b_ref, o_ref, *, RB, Wob, Cin, Cout, phases):
    """One (batch, row-tile) per grid step; phases & taps statically unrolled.

    x_ref: (1, Hc, Wc, Cin)        compact zero-padded input (VMEM)
    w_ref: (PH, Cout, Kmax)        per-phase folded weights, K = taps*Cin
    b_ref: (Cout, 1)
    o_ref: (1, PH, Cout, RB*Wob)   this tile's per-phase output rows (lane-dense)
    """
    r = pl.program_id(1)
    row0 = r * RB
    bias = b_ref[...]                                      # (Cout, 1)
    P = RB * Wob
    for p_idx, (aoffh, aoffw) in enumerate(phases):
        ntaps = len(aoffh) * len(aoffw)
        if ntaps == 0:
            # phase with no contributing taps (possible for stride > kernel extent)
            o_ref[0, p_idx, :, :] = jnp.broadcast_to(bias, (Cout, P)).astype(o_ref.dtype)
            continue
        pieces = []
        for rh in aoffh:
            # one strip load per tap-row (dynamic start only on the untiled H dim)
            rows = x_ref[0, pl.ds(row0 + rh, RB), :, :]    # (RB, Wc, Cin)
            for cw in aoffw:
                pieces.append(rows[:, cw:cw + Wob, :])     # (RB, Wob, Cin) static slice
        patch = pieces[0] if ntaps == 1 else jnp.concatenate(pieces, axis=-1)
        patch = patch.reshape(P, ntaps * Cin)              # (pixels, taps*Cin)
        wp = w_ref[p_idx, :, :ntaps * Cin]                 # (Cout, taps*Cin)
        # "NT" GEMM: contract both on their last dim -> (Cout, pixels), pixels on lanes.
        out = lax.dot_general(wp, patch,
                              dimension_numbers=(((1,), (1,)), ((), ())),
                              preferred_element_type=jnp.float32)
        o_ref[0, p_idx, :, :] = (out + bias).astype(o_ref.dtype)


def linear_conv_transpose_2d(x, weight, bias, stride, padding, output_padding, dilation):
    """Forward of LinearConvTranspose2d.

    x:      (N, Cin, H, W)      float32, NCHW (PyTorch convention)
    weight: (Cin, Cout, Kh, Kw) float32
    bias:   (Cout,) or None
    padding: ((p1h, p2h), (p1w, p2w))  per-axis (before, after) pads
    """
    N, Cin, Hi, Wi = x.shape
    _, Cout, Kh, Kw = weight.shape
    sh, sw = stride
    dh, dw = dilation
    (p1h, p2h), (p1w, p2w) = padding
    oph, opw = output_padding

    Ho = (Hi - 1) * sh - p1h - p2h + dh * (Kh - 1) + oph + 1
    Wo = (Wi - 1) * sw - p1w - p2w + dw * (Kw - 1) + opw + 1
    PH = sh * sw

    # Static phase/tap tables (handles any padding sign, including the
    # padding > dilation*(kernel-1) case the previous version refused).
    taps_h = _phase_taps(sh, dh, Kh, p1h)
    taps_w = _phase_taps(sw, dw, Kw, p1w)

    Hob = -(-Ho // sh)       # per-phase output rows (uniform; extras cropped later)
    Wob = -(-Wo // sw)       # per-phase output cols

    # --- row tiling: RB*Wob must be a multiple of 128 (lane-dense, unmasked
    #     stores) unless the block spans the full extent.
    lane = 128
    step = lane // math.gcd(Wob, lane)
    if Hob > step:
        n_rt = max(2, min(8, Hob // step))
        RB = -(-Hob // n_rt)
        RB = -(-RB // step) * step
        n_rt = -(-Hob // RB)
    else:
        RB, n_rt = Hob, 1
    Hob_pad = RB * n_rt

    # --- compact input + zero halo (no stride upsampling!) -------------------
    offs_h = [o for lst in taps_h for (_, o) in lst] or [0]
    offs_w = [o for lst in taps_w for (_, o) in lst] or [0]
    padl_h = max(0, -min(offs_h))
    padl_w = max(0, -min(offs_w))
    padr_h = max(0, (Hob_pad - 1) + max(offs_h) + 1 - Hi)
    padr_w = max(0, (Wob - 1) + max(offs_w) + 1 - Wi)
    Hc = padl_h + Hi + padr_h
    Wc = padl_w + Wi + padr_w

    x_nhwc = jnp.transpose(x, (0, 2, 3, 1))
    x_c = jnp.pad(x_nhwc, ((0, 0), (padl_h, padr_h), (padl_w, padr_w), (0, 0)))
    # TODO(synk): with Cin=4 the input lane axis stays sparse; a spatial-major
    # input layout would need costly in-kernel relayouts at these channel counts.

    # --- per-phase folded weights: (PH, Cout, Kmax), K index = (th, tw, ci) ---
    w_oc = jnp.transpose(weight, (1, 0, 2, 3))             # (Cout, Cin, Kh, Kw)
    k_sizes = [len(taps_h[ph]) * len(taps_w[pw]) * Cin
               for ph in range(sh) for pw in range(sw)]
    Kmax = max([Cin] + k_sizes)
    phase_w, phase_meta = [], []
    for ph in range(sh):
        for pw in range(sw):
            cols = [w_oc[:, :, kh, kw]
                    for (kh, _) in taps_h[ph] for (kw, _) in taps_w[pw]]
            if cols:
                wp = jnp.concatenate(cols, axis=1)          # (Cout, ntaps*Cin)
            else:
                wp = jnp.zeros((Cout, 0), weight.dtype)
            wp = jnp.pad(wp, ((0, 0), (0, Kmax - wp.shape[1])))
            phase_w.append(wp)
            phase_meta.append((tuple(padl_h + o for (_, o) in taps_h[ph]),
                               tuple(padl_w + o for (_, o) in taps_w[pw])))
    w_all = jnp.stack(phase_w, axis=0).astype(jnp.float32)  # (PH, Cout, Kmax)

    b = bias if bias is not None else jnp.zeros((Cout,), x.dtype)
    b2 = b.reshape(Cout, 1).astype(jnp.float32)

    kern = partial(_deconv_phase_kernel, RB=RB, Wob=Wob, Cin=Cin, Cout=Cout,
                   phases=tuple(phase_meta))

    out_ph = pl.pallas_call(
        kern,
        out_shape=jax.ShapeDtypeStruct((N, PH, Cout, Hob_pad * Wob), x.dtype),
        grid=(N, n_rt),
        in_specs=[
            # same input block for every row-tile of a batch element -> no re-DMA
            pl.BlockSpec((1, Hc, Wc, Cin), lambda n, r: (n, 0, 0, 0)),
            pl.BlockSpec((PH, Cout, Kmax), lambda n, r: (0, 0, 0)),
            pl.BlockSpec((Cout, 1), lambda n, r: (0, 0)),
        ],
        out_specs=pl.BlockSpec((1, PH, Cout, RB * Wob), lambda n, r: (n, 0, 0, r)),
        compiler_params=pltpu.CompilerParams(
            dimension_semantics=("parallel", "parallel")),
    )(x_c, w_all, b2)

    # --- phase interleave -> NCHW, crop the uniform-phase over-compute --------
    out = out_ph.reshape(N, sh, sw, Cout, Hob_pad, Wob)
    out = jnp.transpose(out, (0, 3, 4, 1, 5, 2))            # (N,Cout,Hob,sh,Wob,sw)
    out = out.reshape(N, Cout, Hob_pad * sh, Wob * sw)
    return out[:, :, :Ho, :Wo]


def ref_conv_transpose_2d(x, w, b, stride, padding, output_padding, dilation):
    """Brute-force numpy reference with PyTorch conv_transpose2d semantics."""
    N, Cin, Hi, Wi = x.shape
    _, Cout, Kh, Kw = w.shape
    sh, sw = stride
    dh, dw = dilation
    (p1h, p2h), (p1w, p2w) = padding
    oph, opw = output_padding
    Hf = (Hi - 1) * sh + dh * (Kh - 1) + 1 + oph
    Wf = (Wi - 1) * sw + dw * (Kw - 1) + 1 + opw
    full = np.zeros((N, Cout, Hf, Wf), np.float32)
    for kh in range(Kh):
        for kw in range(Kw):
            contrib = np.einsum('nchw,co->nohw', x, w[:, :, kh, kw])
            oh0, ow0 = kh * dh, kw * dw
            full[:, :, oh0:oh0 + (Hi - 1) * sh + 1:sh,
                       ow0:ow0 + (Wi - 1) * sw + 1:sw] += contrib
    out = full[:, :, p1h:Hf - p2h, p1w:Wf - p2w]
    if b is not None:
        out = out + b[None, :, None, None]
    return out


if __name__ == "__main__":
    # Module config (LinearConvTranspose2d): in=4, out=8, kernel=3, stride=2,
    # padding=1 (symmetric), output_padding=1, dilation=1, use_bias=True.
    N, Cin, Cout, Hi, Wi, K = 2, 4, 8, 16, 16, 3
    stride = (2, 2)
    padding = ((1, 1), (1, 1))
    output_padding = (1, 1)
    dilation = (1, 1)

    key = jax.random.PRNGKey(0)
    kx, kw, kb = jax.random.split(key, 3)
    x = jax.random.normal(kx, (N, Cin, Hi, Wi), jnp.float32)

    # kaiming-uniform-style weight init (shape [Cin, Cout, K, K]).
    fan_in = Cin * K * K
    bound = float(np.sqrt(6.0 / fan_in))
    w = jax.random.uniform(kw, (Cin, Cout, K, K), jnp.float32, -bound, bound)
    # DEFAULT_BIAS_INIT is zeros; use a nonzero deterministic bias so the bias
    # path of the forward is actually exercised by the check.
    b = 0.1 * jax.random.normal(kb, (Cout,), jnp.float32)

    out = linear_conv_transpose_2d(x, w, b, stride, padding, output_padding, dilation)
    out = jax.block_until_ready(out)

    ref = ref_conv_transpose_2d(np.asarray(x), np.asarray(w), np.asarray(b),
                                stride, padding, output_padding, dilation)
    assert out.shape == (N, Cout, 32, 32), out.shape
    np.testing.assert_allclose(np.asarray(out), ref, rtol=1e-4, atol=1e-4)
    print("KERNEL_OK")
</pallas_src>

<mosaic_0001>
module attributes {stable_mosaic.version = 11 : i64} {
  func.func @_deconv_phase_kernel(%arg0: i32, %arg1: i32, %arg2: memref<1x17x17x4xf32, #tpu.memory_space<vmem>>, %arg3: memref<4x8x16xf32, #tpu.memory_space<vmem>>, %arg4: memref<8x1xf32, #tpu.memory_space<vmem>>, %arg5: memref<1x4x8x128xf32, #tpu.memory_space<vmem>>) attributes {dimension_semantics = [#tpu.dimension_semantics<parallel>, #tpu.dimension_semantics<parallel>], iteration_bounds = array<i64: 2, 2>, scalar_prefetch = 0 : i64, scratch_operands = 0 : i64, tpu.core_type = #tpu.core_type<tc>, window_params = [{transform_indices = @transform_0, window_bounds = array<i64: 1, 17, 17, 4>}, {pipeline_mode = #tpu.pipeline_mode<synchronous>, transform_indices = @transform_1, window_bounds = array<i64: 4, 8, 16>}, {pipeline_mode = #tpu.pipeline_mode<synchronous>, transform_indices = @transform_2, window_bounds = array<i64: 8, 1>}, {transform_indices = @transform_3, window_bounds = array<i64: 1, 4, 8, 128>}]} {
    %c8_i32 = arith.constant 8 : i32
    %0 = arith.muli %arg1, %c8_i32 : i32
    %c0 = arith.constant 0 : index
    %c0_0 = arith.constant 0 : index
    %1 = vector.load %arg4[%c0, %c0_0] : memref<8x1xf32, #tpu.memory_space<vmem>>, vector<8x1xf32>
    %c0_i32 = arith.constant 0 : i32
    %2 = arith.addi %0, %c0_i32 : i32
    %c0_1 = arith.constant 0 : index
    %3 = arith.index_cast %2 : i32 to index
    %c0_2 = arith.constant 0 : index
    %c0_3 = arith.constant 0 : index
    %4 = vector.load %arg2[%c0_1, %3, %c0_2, %c0_3] : memref<1x17x17x4xf32, #tpu.memory_space<vmem>>, vector<1x8x17x4xf32>
    %5 = vector.shape_cast %4 : vector<1x8x17x4xf32> to vector<8x17x4xf32>
    %6 = vector.extract_strided_slice %5 {offsets = [0, 0, 0], sizes = [8, 16, 4], strides = [1, 1, 1]} : vector<8x17x4xf32> to vector<8x16x4xf32>
    %7 = vector.shape_cast %6 : vector<8x16x4xf32> to vector<128x4xf32>
    %c0_4 = arith.constant 0 : index
    %c0_5 = arith.constant 0 : index
    %c0_6 = arith.constant 0 : index
    %8 = vector.load %arg3[%c0_4, %c0_5, %c0_6] : memref<4x8x16xf32, #tpu.memory_space<vmem>>, vector<1x8x4xf32>
    %9 = vector.shape_cast %8 : vector<1x8x4xf32> to vector<8x4xf32>
    %cst = arith.constant dense<0.000000e+00> : vector<8x128xf32>
    %10 = tpu.matmul %9, %7, %cst {dimension_numbers = #tpu.dot_dimension_numbers<[1], [1], [0], [0], [0, 0, 1, 0], [], []>} : vector<8x4xf32>, vector<128x4xf32>, vector<8x128xf32> -> vector<8x128xf32>
    %11 = vector.broadcast %1 : vector<8x1xf32> to vector<8x128xf32>
    %12 = arith.addf %10, %11 : vector<8x128xf32>
    %c0_7 = arith.constant 0 : index
    %c0_8 = arith.constant 0 : index
    %c0_9 = arith.constant 0 : index
    %c0_10 = arith.constant 0 : index
    %13 = vector.load %arg5[%c0_7, %c0_8, %c0_9, %c0_10] : memref<1x4x8x128xf32, #tpu.memory_space<vmem>>, vector<1x1x8x128xf32>
    %14 = vector.shape_cast %13 : vector<1x1x8x128xf32> to vector<8x128xf32>
    %15 = vector.shape_cast %12 : vector<8x128xf32> to vector<1x1x8x128xf32>
    tpu.vector_store %arg5[%c0_7, %c0_8, %c0_9, %c0_10], %15 {strides = array<i32>} : memref<1x4x8x128xf32, #tpu.memory_space<vmem>>, vector<1x1x8x128xf32>,
    %c0_i32_11 = arith.constant 0 : i32
    %16 = arith.addi %0, %c0_i32_11 : i32
    %c0_12 = arith.constant 0 : index
    %17 = arith.index_cast %16 : i32 to index
    %c0_13 = arith.constant 0 : index
    %c0_14 = arith.constant 0 : index
    %18 = vector.load %arg2[%c0_12, %17, %c0_13, %c0_14] : memref<1x17x17x4xf32, #tpu.memory_space<vmem>>, vector<1x8x17x4xf32>
    %19 = vector.shape_cast %18 : vector<1x8x17x4xf32> to vector<8x17x4xf32>
    %20 = vector.extract_strided_slice %19 {offsets = [0, 1, 0], sizes = [8, 16, 4], strides = [1, 1, 1]} : vector<8x17x4xf32> to vector<8x16x4xf32>
    %21 = vector.extract_strided_slice %19 {offsets = [0, 0, 0], sizes = [8, 16, 4], strides = [1, 1, 1]} : vector<8x17x4xf32> to vector<8x16x4xf32>
    %22 = tpu.concatenate %20, %21 in 2 : vector<8x16x4xf32>, vector<8x16x4xf32> -> vector<8x16x8xf32>
    %23 = vector.shape_cast %22 : vector<8x16x8xf32> to vector<128x8xf32>
    %c1 = arith.constant 1 : index
    %c0_15 = arith.constant 0 : index
    %c0_16 = arith.constant 0 : index
    %24 = vector.load %arg3[%c1, %c0_15, %c0_16] : memref<4x8x16xf32, #tpu.memory_space<vmem>>, vector<1x8x8xf32>
    %25 = vector.shape_cast %24 : vector<1x8x8xf32> to vector<8x8xf32>
    %cst_17 = arith.constant dense<0.000000e+00> : vector<8x128xf32>
    %26 = tpu.matmul %25, %23, %cst_17 {dimension_numbers = #tpu.dot_dimension_numbers<[1], [1], [0], [0], [0, 0, 1, 0], [], []>} : vector<8x8xf32>, vector<128x8xf32>, vector<8x128xf32> -> vector<8x128xf32>
    %27 = vector.broadcast %1 : vector<8x1xf32> to vector<8x128xf32>
    %28 = arith.addf %26, %27 : vector<8x128xf32>
    %c0_18 = arith.constant 0 : index
    %c1_19 = arith.constant 1 : index
    %c0_20 = arith.constant 0 : index
    %c0_21 = arith.constant 0 : index
    %29 = vector.load %arg5[%c0_18, %c1_19, %c0_20, %c0_21] : memref<1x4x8x128xf32, #tpu.memory_space<vmem>>, vector<1x1x8x128xf32>
    %30 = vector.shape_cast %29 : vector<1x1x8x128xf32> to vector<8x128xf32>
    %31 = vector.shape_cast %28 : vector<8x128xf32> to vector<1x1x8x128xf32>
    tpu.vector_store %arg5[%c0_18, %c1_19, %c0_20, %c0_21], %31 {strides = array<i32>} : memref<1x4x8x128xf32, #tpu.memory_space<vmem>>, vector<1x1x8x128xf32>,
    %c1_i32 = arith.constant 1 : i32
    %32 = arith.addi %0, %c1_i32 : i32
    %c0_22 = arith.constant 0 : index
    %33 = arith.index_cast %32 : i32 to index
    %c0_23 = arith.constant 0 : index
    %c0_24 = arith.constant 0 : index
    %34 = vector.load %arg2[%c0_22, %33, %c0_23, %c0_24] : memref<1x17x17x4xf32, #tpu.memory_space<vmem>>, vector<1x8x17x4xf32>
    %35 = vector.shape_cast %34 : vector<1x8x17x4xf32> to vector<8x17x4xf32>
    %36 = vector.extract_strided_slice %35 {offsets = [0, 0, 0], sizes = [8, 16, 4], strides = [1, 1, 1]} : vector<8x17x4xf32> to vector<8x16x4xf32>
    %c0_i32_25 = arith.constant 0 : i32
    %37 = arith.addi %0, %c0_i32_25 : i32
    %c0_26 = arith.constant 0 : index
    %38 = arith.index_cast %37 : i32 to index
    %c0_27 = arith.constant 0 : index
    %c0_28 = arith.constant 0 : index
    %39 = vector.load %arg2[%c0_26, %38, %c0_27, %c0_28] : memref<1x17x17x4xf32, #tpu.memory_space<vmem>>, vector<1x8x17x4xf32>
    %40 = vector.shape_cast %39 : vector<1x8x17x4xf32> to vector<8x17x4xf32>
    %41 = vector.extract_strided_slice %40 {offsets = [0, 0, 0], sizes = [8, 16, 4], strides = [1, 1, 1]} : vector<8x17x4xf32> to vector<8x16x4xf32>
    %42 = tpu.concatenate %36, %41 in 2 : vector<8x16x4xf32>, vector<8x16x4xf32> -> vector<8x16x8xf32>
    %43 = vector.shape_cast %42 : vector<8x16x8xf32> to vector<128x8xf32>
    %c2 = arith.constant 2 : index
    %c0_29 = arith.constant 0 : index
    %c0_30 = arith.constant 0 : index
    %44 = vector.load %arg3[%c2, %c0_29, %c0_30] : memref<4x8x16xf32, #tpu.memory_space<vmem>>, vector<1x8x8xf32>
    %45 = vector.shape_cast %44 : vector<1x8x8xf32> to vector<8x8xf32>
    %cst_31 = arith.constant dense<0.000000e+00> : vector<8x128xf32>
    %46 = tpu.matmul %45, %43, %cst_31 {dimension_numbers = #tpu.dot_dimension_numbers<[1], [1], [0], [0], [0, 0, 1, 0], [], []>} : vector<8x8xf32>, vector<128x8xf32>, vector<8x128xf32> -> vector<8x128xf32>
    %47 = vector.broadcast %1 : vector<8x1xf32> to vector<8x128xf32>
    %48 = arith.addf %46, %47 : vector<8x128xf32>
    %c0_32 = arith.constant 0 : index
    %c2_33 = arith.constant 2 : index
    %c0_34 = arith.constant 0 : index
    %c0_35 = arith.constant 0 : index
    %49 = vector.load %arg5[%c0_32, %c2_33, %c0_34, %c0_35] : memref<1x4x8x128xf32, #tpu.memory_space<vmem>>, vector<1x1x8x128xf32>
    %50 = vector.shape_cast %49 : vector<1x1x8x128xf32> to vector<8x128xf32>
    %51 = vector.shape_cast %48 : vector<8x128xf32> to vector<1x1x8x128xf32>
    tpu.vector_store %arg5[%c0_32, %c2_33, %c0_34, %c0_35], %51 {strides = array<i32>} : memref<1x4x8x128xf32, #tpu.memory_space<vmem>>, vector<1x1x8x128xf32>,
    %c1_i32_36 = arith.constant 1 : i32
    %52 = arith.addi %0, %c1_i32_36 : i32
    %c0_37 = arith.constant 0 : index
    %53 = arith.index_cast %52 : i32 to index
    %c0_38 = arith.constant 0 : index
    %c0_39 = arith.constant 0 : index
    %54 = vector.load %arg2[%c0_37, %53, %c0_38, %c0_39] : memref<1x17x17x4xf32, #tpu.memory_space<vmem>>, vector<1x8x17x4xf32>
    %55 = vector.shape_cast %54 : vector<1x8x17x4xf32> to vector<8x17x4xf32>
    %56 = vector.extract_strided_slice %55 {offsets = [0, 1, 0], sizes = [8, 16, 4], strides = [1, 1, 1]} : vector<8x17x4xf32> to vector<8x16x4xf32>
    %57 = vector.extract_strided_slice %55 {offsets = [0, 0, 0], sizes = [8, 16, 4], strides = [1, 1, 1]} : vector<8x17x4xf32> to vector<8x16x4xf32>
    %c0_i32_40 = arith.constant 0 : i32
    %58 = arith.addi %0, %c0_i32_40 : i32
    %c0_41 = arith.constant 0 : index
    %59 = arith.index_cast %58 : i32 to index
    %c0_42 = arith.constant 0 : index
    %c0_43 = arith.constant 0 : index
    %60 = vector.load %arg2[%c0_41, %59, %c0_42, %c0_43] : memref<1x17x17x4xf32, #tpu.memory_space<vmem>>, vector<1x8x17x4xf32>
    %61 = vector.shape_cast %60 : vector<1x8x17x4xf32> to vector<8x17x4xf32>
    %62 = vector.extract_strided_slice %61 {offsets = [0, 1, 0], sizes = [8, 16, 4], strides = [1, 1, 1]} : vector<8x17x4xf32> to vector<8x16x4xf32>
    %63 = vector.extract_strided_slice %61 {offsets = [0, 0, 0], sizes = [8, 16, 4], strides = [1, 1, 1]} : vector<8x17x4xf32> to vector<8x16x4xf32>
    %64 = tpu.concatenate %56, %57, %62, %63 in 2 : vector<8x16x4xf32>, vector<8x16x4xf32>, vector<8x16x4xf32>, vector<8x16x4xf32> -> vector<8x16x16xf32>
    %65 = vector.shape_cast %64 : vector<8x16x16xf32> to vector<128x16xf32>
    %c3 = arith.constant 3 : index
    %c0_44 = arith.constant 0 : index
    %c0_45 = arith.constant 0 : index
    %66 = vector.load %arg3[%c3, %c0_44, %c0_45] : memref<4x8x16xf32, #tpu.memory_space<vmem>>, vector<1x8x16xf32>
    %67 = vector.shape_cast %66 : vector<1x8x16xf32> to vector<8x16xf32>
    %cst_46 = arith.constant dense<0.000000e+00> : vector<8x128xf32>
    %68 = tpu.matmul %67, %65, %cst_46 {dimension_numbers = #tpu.dot_dimension_numbers<[1], [1], [0], [0], [0, 0, 1, 0], [], []>} : vector<8x16xf32>, vector<128x16xf32>, vector<8x128xf32> -> vector<8x128xf32>
    %69 = vector.broadcast %1 : vector<8x1xf32> to vector<8x128xf32>
    %70 = arith.addf %68, %69 : vector<8x128xf32>
    %c0_47 = arith.constant 0 : index
    %c3_48 = arith.constant 3 : index
    %c0_49 = arith.constant 0 : index
    %c0_50 = arith.constant 0 : index
    %71 = vector.load %arg5[%c0_47, %c3_48, %c0_49, %c0_50] : memref<1x4x8x128xf32, #tpu.memory_space<vmem>>, vector<1x1x8x128xf32>
    %72 = vector.shape_cast %71 : vector<1x1x8x128xf32> to vector<8x128xf32>
    %73 = vector.shape_cast %70 : vector<8x128xf32> to vector<1x1x8x128xf32>
    tpu.vector_store %arg5[%c0_47, %c3_48, %c0_49, %c0_50], %73 {strides = array<i32>} : memref<1x4x8x128xf32, #tpu.memory_space<vmem>>, vector<1x1x8x128xf32>,
    return
  }
  func.func @transform_0(%arg0: i32, %arg1: i32) -> (i32, i32, i32, i32) {
    %c0_i32 = arith.constant 0 : i32
    %c0_i32_0 = arith.constant 0 : i32
    %c0_i32_1 = arith.constant 0 : i32
    %c0_i32_2 = arith.constant 0 : i32
    return %arg0, %c0_i32, %c0_i32_0, %c0_i32_1 : i32, i32, i32, i32
  }
  func.func @transform_1(%arg0: i32, %arg1: i32) -> (i32, i32, i32) {
    %c0_i32 = arith.constant 0 : i32
    %c0_i32_0 = arith.constant 0 : i32
    %c0_i32_1 = arith.constant 0 : i32
    %c0_i32_2 = arith.constant 0 : i32
    return %c0_i32, %c0_i32_0, %c0_i32_1 : i32, i32, i32
  }
  func.func @transform_2(%arg0: i32, %arg1: i32) -> (i32, i32) {
    %c0_i32 = arith.constant 0 : i32
    %c0_i32_0 = arith.constant 0 : i32
    %c0_i32_1 = arith.constant 0 : i32
    return %c0_i32, %c0_i32_0 : i32, i32
  }
  func.func @transform_3(%arg0: i32, %arg1: i32) -> (i32, i32, i32, i32) {
    %c0_i32 = arith.constant 0 : i32
    %c0_i32_0 = arith.constant 0 : i32
    %c0_i32_1 = arith.constant 0 : i32
    return %arg0, %c0_i32, %c0_i32_0, %arg1 : i32, i32, i32, i32
  }
}

</mosaic_0001>

<llo_original>
// kernel: tpu_custom_call.1
$region0: #{tpu_custom_call.1}
  #allocation0 [shape = 'u32[]', space=smem, size = 0x4, offset = 0x4, fixed_abs, tag = 'smem constant byte address 0x4 - core index']
  #allocation1 [shape = 'u32[72,128]{1,0:T(1,128)}', space=vmem, size = 0x9000, scoped, tag = 'internal scratch']
  %s0 = inlined_call_operand.vmem [shape: f32[2,17,17,4], index: 0, kind: input, shape index: {}]
  %s1 = inlined_call_operand.vmem [shape: f32[4,8,16], index: 1, kind: input, shape index: {}]
  %s2 = inlined_call_operand.vmem [shape: f32[8,1], index: 2, kind: input, shape index: {}]
  %s3 = inlined_call_operand.hbm [shape: f32[2,4,8,256], index: 3, kind: output, shape index: {}]
  %s4 = sld [smem:[#allocation0]]
  $region45: #{tpu_custom_call.1} parent=0
    _
  %s6 = ssub.s32 1, %s4
  %s7 = scalar_select 0, %s6, %s4
  $region1: #{tpu_custom_call.1} parent=0
    #allocation2 [shape = 'u8[32768]{0}', space=vmem, size = 0x8000, scoped, tag = 'output window, operand 0']
    #allocation3 [shape = 's32[2]{0}', space=sflag, size = 0x8, scoped, tag = 'scoped memory for tpu_custom_call.1']
    %8 = vsyncpa [#allocation3], 0
    %s9 = scalar_lea.sflag [#allocation3], 1
    %10 = vsyncpa %s9, 0
    loop: start=0, step=1, limit=6
    $region2: #{tpu_custom_call.1} parent=1 // loop_pre_header
      _
    $region3: #{tpu_custom_call.1} parent=1 // loop_header
      %s12 = sphi 0, %s16
      %p13 = scmp.ge.s32.totalorder %s12, 6
      %s19 = sphi 0, %s31
      %s20 = sphi 0, %s27
      %s21 = sphi 0, %s19
      %s22 = sphi 0, %s20
      %s23 = sphi 0, %s21
      %s24 = sphi 0, %s22
      %s34 = sphi 0, %s36
      %s37 = sphi 0, %s34
      %s38 = sphi 0, %s37
      %s54 = sphi 0, %s38
      %s58 = sphi 0, %s58
      %s60 = sphi 0, %s58
      %s61 = sphi 0, %s60
      %s75 = sphi 0, %s61
      %s79 = sphi 0, %s79
      %s81 = sphi 0, %s79
      %s82 = sphi 0, %s81
      %s96 = sphi 0, %s82
      %s104 = sphi 0, %s106
      %s107 = sphi 0, %s104
      %s108 = sphi 0, %s107
      %s124 = sphi 0, %s108
    $region4: #{tpu_custom_call.1} parent=1 // loop_header_branch
      %15 = sbr.rel (%p13) target = $region8
    $region5: #{tpu_custom_call.1} parent=1 // loop_body
      %s17 = ssub.s32 %s12, 1
      %s18 = ssub.s32 %s12, 2
      %s25 = sadd.s32 1, %s20
      %p26 = scmp.ge.s32.totalorder %s25, 2
      %s27 = scalar_select %p26, 0, %s25
      %s28 = sadd.s32 1, %s19
      %s29 = scalar_select %p26, %s28, %s19
      %p30 = scmp.ge.s32.totalorder %s29, 2
      %s31 = scalar_select %p30, 0, %s29
      %s32 = ssub.s32 %s19, %s31
      %p33 = scmp.eq.s32.totalorder %s32, 0
      %s35 = sadd.s32 %s34, 1
      %s36 = scalar_select %p33, %s34, %s35
      %p39 = pneg %p33
      %p40 = scmp.eq.s32.totalorder %s12, 3
      %p41 = por %p39, %p40
      %p42 = scmp.ne.s32.totalorder %s34, %s37
      %p43 = scmp.eq.s32.totalorder %s12, 0
      %p44 = por %p42, %p43
      %p45 = scmp.ne.s32.totalorder %s34, %s37
      %p46 = scmp.eq.s32.totalorder %s17, 3
      %p47 = por %p45, %p46
      %p48 = scmp.ne.s32.totalorder %s37, %s38
      %p49 = scmp.eq.s32.totalorder %s17, 0
      %p50 = por %p48, %p49
      %p51 = scmp.ne.s32.totalorder %s37, %s38
      %p52 = scmp.eq.s32.totalorder %s18, 3
      %p53 = por %p51, %p52
      %p55 = scmp.ne.s32.totalorder %s38, %s54
      %p56 = scmp.eq.s32.totalorder %s18, 0
      %p57 = por %p55, %p56
      %s59 = sadd.s32 %s58, 1
      %p62 = scmp.eq.s32.totalorder %s12, 3
      %p63 = scmp.ne.s32.totalorder %s58, %s60
      %p64 = scmp.eq.s32.totalorder %s12, 0
      %p65 = por %p63, %p64
      %p66 = scmp.ne.s32.totalorder %s58, %s60
      %p67 = scmp.eq.s32.totalorder %s17, 3
      %p68 = por %p66, %p67
      %p69 = scmp.ne.s32.totalorder %s60, %s61
      %p70 = scmp.eq.s32.totalorder %s17, 0
      %p71 = por %p69, %p70
      %p72 = scmp.ne.s32.totalorder %s60, %s61
      %p73 = scmp.eq.s32.totalorder %s18, 3
      %p74 = por %p72, %p73
      %p76 = scmp.ne.s32.totalorder %s61, %s75
      %p77 = scmp.eq.s32.totalorder %s18, 0
      %p78 = por %p76, %p77
      %s80 = sadd.s32 %s79, 1
      %p83 = scmp.eq.s32.totalorder %s12, 3
      %p84 = scmp.ne.s32.totalorder %s79, %s81
      %p85 = scmp.eq.s32.totalorder %s12, 0
      %p86 = por %p84, %p85
      %p87 = scmp.ne.s32.totalorder %s79, %s81
      %p88 = scmp.eq.s32.totalorder %s17, 3
      %p89 = por %p87, %p88
      %p90 = scmp.ne.s32.totalorder %s81, %s82
      %p91 = scmp.eq.s32.totalorder %s17, 0
      %p92 = por %p90, %p91
      %p93 = scmp.ne.s32.totalorder %s81, %s82
      %p94 = scmp.eq.s32.totalorder %s18, 3
      %p95 = por %p93, %p94
      %p97 = scmp.ne.s32.totalorder %s82, %s96
      %p98 = scmp.eq.s32.totalorder %s18, 0
      %p99 = por %p97, %p98
      %s100 = ssub.s32 %s19, %s31
      %s101 = ssub.s32 %s20, %s27
      %s102 = sor.u32 %s100, %s101
      %p103 = scmp.eq.s32.totalorder %s102, 0
      %s105 = sadd.s32 %s104, 1
      %s106 = scalar_select %p103, %s104, %s105
      %p109 = pneg %p103
      %p110 = scmp.eq.s32.totalorder %s12, 3
      %p111 = por %p109, %p110
      %p112 = scmp.ne.s32.totalorder %s104, %s107
      %p113 = scmp.eq.s32.totalorder %s12, 0
      %p114 = por %p112, %p113
      %p115 = scmp.ne.s32.totalorder %s104, %s107
      %p116 = scmp.eq.s32.totalorder %s17, 3
      %p117 = por %p115, %p116
      %p118 = scmp.ne.s32.totalorder %s107, %s108
      %p119 = scmp.eq.s32.totalorder %s17, 0
      %p120 = por %p118, %p119
      %p121 = scmp.ne.s32.totalorder %s107, %s108
      %p122 = scmp.eq.s32.totalorder %s18, 3
      %p123 = por %p121, %p122
      %p125 = scmp.ne.s32.totalorder %s108, %s124
      %p126 = scmp.eq.s32.totalorder %s18, 0
      %p127 = por %p125, %p126
      %p128 = scmp.le.s32.totalorder 1, %s12
      %p129 = scmp.lt.s32.totalorder %s12, 5
      %p130 = pnand %p128, %p129
      %p131 = pneg %p130
      // Predicated region
      $region9: #{tpu_custom_call.1} parent=5 // pred_check
        _
      $region10: #{tpu_custom_call.1} parent=5 // pred_check_branch
        %133 = sbr.rel (%p130) target = $region12
      $region11: #{tpu_custom_call.1} parent=5 // pred_region
        %s134 = ssub.s32 %s12, 1
        // Predicated region
        $region13: #{tpu_custom_call.1} parent=11 // pred_check
          %p135 = pneg %p71
        $region14: #{tpu_custom_call.1} parent=11 // pred_check_branch
          %137 = sbr.rel (%p135) target = $region16
        $region15: #{tpu_custom_call.1} parent=11 // pred_region
          _
        $region16: #{tpu_custom_call.1} parent=11 // pred_fallthru
          _
        // Predicated region
        $region17: #{tpu_custom_call.1} parent=11 // pred_check
          %p138 = pneg %p92
        $region18: #{tpu_custom_call.1} parent=11 // pred_check_branch
          %140 = sbr.rel (%p138) target = $region20
        $region19: #{tpu_custom_call.1} parent=11 // pred_region
          _
        $region20: #{tpu_custom_call.1} parent=11 // pred_fallthru
          _
      $region12: #{tpu_custom_call.1} parent=5 // pred_fallthru
        _
      %p141 = scmp.lt.s32.totalorder %s12, 4
      // Predicated region
      $region21: #{tpu_custom_call.1} parent=5 // pred_check
        %p142 = pneg %p141
      $region22: #{tpu_custom_call.1} parent=5 // pred_check_branch
        %144 = sbr.rel (%p142) target = $region24
      $region23: #{tpu_custom_call.1} parent=5 // pred_region
        // Predicated region
        $region25: #{tpu_custom_call.1} parent=23 // pred_check
          %p145 = pneg %p44
        $region26: #{tpu_custom_call.1} parent=23 // pred_check_branch
          %147 = sbr.rel (%p145) target = $region28
        $region27: #{tpu_custom_call.1} parent=23 // pred_region
          %p148 = scmp.lt.s32.totalorder %s19, 1
          %s149 = scalar_select %p148, %s19, 1
          %s150 = smul.addr %s149, 51
          %s151 = smul.addr %s150, 8
          %s152 = scalar_lea.vmem %s0, %s151
        $region28: #{tpu_custom_call.1} parent=23 // pred_fallthru
          _
      $region24: #{tpu_custom_call.1} parent=5 // pred_fallthru
        _
      %p153 = scmp.le.s32.totalorder 1, %s12
      %p154 = scmp.lt.s32.totalorder %s12, 5
      %p155 = pnand %p153, %p154
      %p156 = pneg %p155
      // Predicated region
      $region29: #{tpu_custom_call.1} parent=5 // pred_check
        _
      $region30: #{tpu_custom_call.1} parent=5 // pred_check_branch
        %158 = sbr.rel (%p155) target = $region32
      $region31: #{tpu_custom_call.1} parent=5 // pred_region
        %s159 = ssub.s32 %s12, 1
        %p160 = scmp.lt.s32.totalorder %s21, 1
        %s161 = scalar_select %p160, %s21, 1
        %s162 = smul.addr %s161, 51
        %s163 = smul.addr %s162, 8
        %s164 = scalar_lea.vmem %s0, %s163
        %p165 = pneg %p50
        %p166 = pneg %p47
        %p167 = pneg %p71
        %p168 = pneg %p68
        %p169 = pneg %p92
        %p170 = pneg %p89
        %p171 = pneg %p120
        %p172 = pneg %p117
        %s173 = sand.u32 %s107, 1
        %s174 = scalar_lea.sflag [#allocation3], %s173
        %s175 = sand.u32 %s107, 1
        %s176 = smul.addr %s175, 32
        %s177 = scalar_lea.vmem [#allocation2], %s176
        %p178 = scmp.lt.s32.totalorder %s21, 1
        %s179 = scalar_select %p178, %s21, 1
        %s180 = smul.addr %s179, 51
        %s181 = smul.addr %s180, 8
        %s182 = scalar_lea.vmem %s0, %s181
        %s183 = smul.u32 %s22, 8
        %v184 = vld [vmem:[%s2] sm:$0xff]
        %s185 = smul.u32 %s183, 24
        %s186 = scalar_lea.vmem %s182, %s185
        %v187 = vld [vmem:[%s186] sm:$0xff]
        %v188 = vld [vmem:[%s186 + $0x8] sm:$0xff]
        %v189 = vld [vmem:[%s186 + $0x18] sm:$0xff]
        %v190 = vld [vmem:[%s186 + $0x20] sm:$0xff]
        %v191 = vld [vmem:[%s186 + $0x30] sm:$0xff]
        %v192 = vld [vmem:[%s186 + $0x38] sm:$0xff]
        %v193 = vld [vmem:[%s186 + $0x48] sm:$0xff]
        %v194 = vld [vmem:[%s186 + $0x50] sm:$0xff]
        %v195 = vld [vmem:[%s186 + $0x60] sm:$0xff]
        %v196 = vld [vmem:[%s186 + $0x68] sm:$0xff]
        %v197 = vld [vmem:[%s186 + $0x78] sm:$0xff]
        %v198 = vld [vmem:[%s186 + $0x80] sm:$0xff]
        %v199 = vld [vmem:[%s186 + $0x90] sm:$0xff]
        %v200 = vld [vmem:[%s186 + $0x98] sm:$0xff]
        %v201 = vld [vmem:[%s186 + $0xa8] sm:$0xff]
        %v202 = vld [vmem:[%s186 + $0xb0] sm:$0xff]
        %v203 = vld [vmem:[%s1] sm:$0xff]
        %205 = vset.pattern.permute.xlu0 0
        %206 = vperm.xlu0 %205, %v184
        %v207 = vpop.permute.xlu0 %206
        %vm209 = vcmask 31744
        %v211 = vsel %vm209, %v203, 0
        %v214 = vsel %vm209, %v187, 0
        %v217 = vsel %vm209, %v188, 0
        %v220 = vsel %vm209, %v189, 0
        %v223 = vsel %vm209, %v190, 0
        %v226 = vsel %vm209, %v191, 0
        %v229 = vsel %vm209, %v192, 0
        %v232 = vsel %vm209, %v193, 0
        %v235 = vsel %vm209, %v194, 0
        %v238 = vsel %vm209, %v195, 0
        %v241 = vsel %vm209, %v196, 0
        %v244 = vsel %vm209, %v197, 0
        %v247 = vsel %vm209, %v198, 0
        %v250 = vsel %vm209, %v199, 0
        %v253 = vsel %vm209, %v200, 0
        %v256 = vsel %vm209, %v201, 0
        %v259 = vsel %vm209, %v202, 0
        %261 = vmatpush.xpose.msra.mxu0 %v259
        %262 = vmatpush.xpose.msra.mxu0 %v256
        %263 = vmatpush.xpose.msra.mxu0 %v253
        %264 = vmatpush.xpose.msra.mxu0 %v250
        %265 = vmatpush.xpose.msra.mxu0 %v247
        %266 = vmatpush.xpose.msra.mxu0 %v244
        %267 = vmatpush.xpose.msra.mxu0 %v241
        %268 = vmatpush.xpose.msra.mxu0 %v238
        %269 = vmatpush.xpose.msra.mxu0 %v235
        %270 = vmatpush.xpose.msra.mxu0 %v232
        %271 = vmatpush.xpose.msra.mxu0 %v229
        %272 = vmatpush.xpose.msra.mxu0 %v226
        %273 = vmatpush.xpose.msra.mxu0 %v223
        %274 = vmatpush.xpose.msra.mxu0 %v220
        %275 = vmatpush.xpose.msra.mxu0 %v217
        %276 = vmatpush.xpose.msra.mxu0 %v214
        %277 = vmatmul.f32.gmra.mxu0 %v211
        %v278 = vpop.f32.mrf.mxu0
        %v279 = vadd.f32 %v207, %v278
        %280 = vdwg.mxu0
        %281 = vst [vmem:[%s177] sm:$0xff] %v279
        %v282 = vld [vmem:[%s186] sm:$0xff]
        %v283 = vld [vmem:[%s186 + $0x8] sm:$0xff]
        %v284 = vld [vmem:[%s186 + $0x10] sm:$0x1]
        %v285 = vld [vmem:[%s186 + $0x18] sm:$0xff]
        %v286 = vld [vmem:[%s186 + $0x20] sm:$0xff]
        %v287 = vld [vmem:[%s186 + $0x28] sm:$0x1]
        %v288 = vld [vmem:[%s186 + $0x30] sm:$0xff]
        %v289 = vld [vmem:[%s186 + $0x38] sm:$0xff]
        %v290 = vld [vmem:[%s186 + $0x40] sm:$0x1]
        %v291 = vld [vmem:[%s186 + $0x48] sm:$0xff]
        %v292 = vld [vmem:[%s186 + $0x50] sm:$0xff]
        %v293 = vld [vmem:[%s186 + $0x58] sm:$0x1]
        %v294 = vld [vmem:[%s186 + $0x60] sm:$0xff]
        %v295 = vld [vmem:[%s186 + $0x68] sm:$0xff]
        %v296 = vld [vmem:[%s186 + $0x70] sm:$0x1]
        %v297 = vld [vmem:[%s186 + $0x78] sm:$0xff]
        %v298 = vld [vmem:[%s186 + $0x80] sm:$0xff]
        %v299 = vld [vmem:[%s186 + $0x88] sm:$0x1]
        %v300 = vld [vmem:[%s186 + $0x90] sm:$0xff]
        %v301 = vld [vmem:[%s186 + $0x98] sm:$0xff]
        %v302 = vld [vmem:[%s186 + $0xa0] sm:$0x1]
        %v303 = vld [vmem:[%s186 + $0xa8] sm:$0xff]
        %v304 = vld [vmem:[%s186 + $0xb0] sm:$0xff]
        %v305 = vld [vmem:[%s186 + $0xb8] sm:$0x1]
        %vm322 = vcmask 1040384
        %v323 = vrot.slane %v282, 7
        %v324 = vrot.slane %v283, 7
        %v325 = vsel %vm322, %v323, %v324
        %v326 = vrot.slane %v285, 7
        %v327 = vrot.slane %v286, 7
        %v328 = vsel %vm322, %v326, %v327
        %v329 = vrot.slane %v288, 7
        %v330 = vrot.slane %v289, 7
        %v331 = vsel %vm322, %v329, %v330
        %v332 = vrot.slane %v291, 7
        %v333 = vrot.slane %v292, 7
        %v334 = vsel %vm322, %v332, %v333
        %v335 = vrot.slane %v294, 7
        %v336 = vrot.slane %v295, 7
        %v337 = vsel %vm322, %v335, %v336
        %v338 = vrot.slane %v297, 7
        %v339 = vrot.slane %v298, 7
        %v340 = vsel %vm322, %v338, %v339
        %v341 = vrot.slane %v300, 7
        %v342 = vrot.slane %v301, 7
        %v343 = vsel %vm322, %v341, %v342
        %v344 = vrot.slane %v303, 7
        %v345 = vrot.slane %v304, 7
        %v346 = vsel %vm322, %v344, %v345
        %347 = vrot.lane.b32.xlu0 %v323, 4
        %v348 = vpop.permute.xlu0 %347
        %349 = vrot.lane.b32.xlu0 %v325, 4
        %v350 = vpop.permute.xlu0 %349
        %351 = vrot.lane.b32.xlu0 %v324, 4
        %v352 = vpop.permute.xlu0 %351
        %353 = vrot.lane.b32.xlu0 %v326, 4
        %v354 = vpop.permute.xlu0 %353
        %355 = vrot.lane.b32.xlu0 %v328, 4
        %v356 = vpop.permute.xlu0 %355
        %357 = vrot.lane.b32.xlu0 %v327, 4
        %v358 = vpop.permute.xlu0 %357
        %359 = vrot.lane.b32.xlu0 %v329, 4
        %v360 = vpop.permute.xlu0 %359
        %361 = vrot.lane.b32.xlu0 %v331, 4
        %v362 = vpop.permute.xlu0 %361
        %363 = vrot.lane.b32.xlu0 %v330, 4
        %v364 = vpop.permute.xlu0 %363
        %365 = vrot.lane.b32.xlu0 %v332, 4
        %v366 = vpop.permute.xlu0 %365
        %367 = vrot.lane.b32.xlu0 %v334, 4
        %v368 = vpop.permute.xlu0 %367
        %369 = vrot.lane.b32.xlu0 %v333, 4
        %v370 = vpop.permute.xlu0 %369
        %371 = vrot.lane.b32.xlu0 %v335, 4
        %v372 = vpop.permute.xlu0 %371
        %373 = vrot.lane.b32.xlu0 %v337, 4
        %v374 = vpop.permute.xlu0 %373
        %375 = vrot.lane.b32.xlu0 %v336, 4
        %v376 = vpop.permute.xlu0 %375
        %377 = vrot.lane.b32.xlu0 %v338, 4
        %v378 = vpop.permute.xlu0 %377
        %379 = vrot.lane.b32.xlu0 %v340, 4
        %v380 = vpop.permute.xlu0 %379
        %381 = vrot.lane.b32.xlu0 %v339, 4
        %v382 = vpop.permute.xlu0 %381
        %383 = vrot.lane.b32.xlu0 %v341, 4
        %v384 = vpop.permute.xlu0 %383
        %385 = vrot.lane.b32.xlu0 %v343, 4
        %v386 = vpop.permute.xlu0 %385
        %387 = vrot.lane.b32.xlu0 %v342, 4
        %v388 = vpop.permute.xlu0 %387
        %389 = vrot.lane.b32.xlu0 %v344, 4
        %v390 = vpop.permute.xlu0 %389
        %391 = vrot.lane.b32.xlu0 %v346, 4
        %v392 = vpop.permute.xlu0 %391
        %393 = vrot.lane.b32.xlu0 %v345, 4
        %v394 = vpop.permute.xlu0 %393
        %v419 = vsel %vm209, %v282, %v348
        %v420 = vsel %vm209, %v283, %v350
        %v421 = vsel %vm209, %v284, %v352
        %v422 = vsel %vm209, %v285, %v354
        %v423 = vsel %vm209, %v286, %v356
        %v424 = vsel %vm209, %v287, %v358
        %v425 = vsel %vm209, %v288, %v360
        %v426 = vsel %vm209, %v289, %v362
        %v427 = vsel %vm209, %v290, %v364
        %v428 = vsel %vm209, %v291, %v366
        %v429 = vsel %vm209, %v292, %v368
        %v430 = vsel %vm209, %v293, %v370
        %v431 = vsel %vm209, %v294, %v372
        %v432 = vsel %vm209, %v295, %v374
        %v433 = vsel %vm209, %v296, %v376
        %v434 = vsel %vm209, %v297, %v378
        %v435 = vsel %vm209, %v298, %v380
        %v436 = vsel %vm209, %v299, %v382
        %v437 = vsel %vm209, %v300, %v384
        %v438 = vsel %vm209, %v301, %v386
        %v439 = vsel %vm209, %v302, %v388
        %v440 = vsel %vm209, %v303, %v390
        %v441 = vsel %vm209, %v304, %v392
        %v442 = vsel %vm209, %v305, %v394
        %vm467 = vcmask 1046528
        %v468 = vrot.slane %v419, 1
        %v469 = vrot.slane %v420, 1
        %v470 = vsel %vm467, %v468, %v469
        %v471 = vrot.slane %v421, 1
        %v472 = vsel %vm467, %v469, %v471
        %v473 = vrot.slane %v422, 1
        %v474 = vrot.slane %v423, 1
        %v475 = vsel %vm467, %v473, %v474
        %v476 = vrot.slane %v424, 1
        %v477 = vsel %vm467, %v474, %v476
        %v478 = vrot.slane %v425, 1
        %v479 = vrot.slane %v426, 1
        %v480 = vsel %vm467, %v478, %v479
        %v481 = vrot.slane %v427, 1
        %v482 = vsel %vm467, %v479, %v481
        %v483 = vrot.slane %v428, 1
        %v484 = vrot.slane %v429, 1
        %v485 = vsel %vm467, %v483, %v484
        %v486 = vrot.slane %v430, 1
        %v487 = vsel %vm467, %v484, %v486
        %v488 = vrot.slane %v431, 1
        %v489 = vrot.slane %v432, 1
        %v490 = vsel %vm467, %v488, %v489
        %v491 = vrot.slane %v433, 1
        %v492 = vsel %vm467, %v489, %v491
        %v493 = vrot.slane %v434, 1
        %v494 = vrot.slane %v435, 1
        %v495 = vsel %vm467, %v493, %v494
        %v496 = vrot.slane %v436, 1
        %v497 = vsel %vm467, %v494, %v496
        %v498 = vrot.slane %v437, 1
        %v499 = vrot.slane %v438, 1
        %v500 = vsel %vm467, %v498, %v499
        %v501 = vrot.slane %v439, 1
        %v502 = vsel %vm467, %v499, %v501
        %v503 = vrot.slane %v440, 1
        %v504 = vrot.slane %v441, 1
        %v505 = vsel %vm467, %v503, %v504
        %v506 = vrot.slane %v442, 1
        %v507 = vsel %vm467, %v504, %v506
        %s508 = scalar_lea.vmem %s1, 8
        %v509 = vld [vmem:[%s508] sm:$0xff]
        %vm510 = vcmask 64512
        %v512 = vsel %vm510, %v509, 0
        %v514 = vsel %vm510, %v470, 0
        %v516 = vsel %vm510, %v472, 0
        %v518 = vsel %vm510, %v475, 0
        %v520 = vsel %vm510, %v477, 0
        %v522 = vsel %vm510, %v480, 0
        %v524 = vsel %vm510, %v482, 0
        %v526 = vsel %vm510, %v485, 0
        %v528 = vsel %vm510, %v487, 0
        %v530 = vsel %vm510, %v490, 0
        %v532 = vsel %vm510, %v492, 0
        %v534 = vsel %vm510, %v495, 0
        %v536 = vsel %vm510, %v497, 0
        %v538 = vsel %vm510, %v500, 0
        %v540 = vsel %vm510, %v502, 0
        %v542 = vsel %vm510, %v505, 0
        %v544 = vsel %vm510, %v507, 0
        %546 = vmatpush.xpose.msra.mxu0 %v544
        %547 = vmatpush.xpose.msra.mxu0 %v542
        %548 = vmatpush.xpose.msra.mxu0 %v540
        %549 = vmatpush.xpose.msra.mxu0 %v538
        %550 = vmatpush.xpose.msra.mxu0 %v536
        %551 = vmatpush.xpose.msra.mxu0 %v534
        %552 = vmatpush.xpose.msra.mxu0 %v532
        %553 = vmatpush.xpose.msra.mxu0 %v530
        %554 = vmatpush.xpose.msra.mxu0 %v528
        %555 = vmatpush.xpose.msra.mxu0 %v526
        %556 = vmatpush.xpose.msra.mxu0 %v524
        %557 = vmatpush.xpose.msra.mxu0 %v522
        %558 = vmatpush.xpose.msra.mxu0 %v520
        %559 = vmatpush.xpose.msra.mxu0 %v518
        %560 = vmatpush.xpose.msra.mxu0 %v516
        %561 = vmatpush.xpose.msra.mxu0 %v514
        %562 = vmatmul.f32.gmra.mxu0 %v512
        %v563 = vpop.f32.mrf.mxu0
        %v564 = vadd.f32 %v207, %v563
        %565 = vdwg.mxu0
        %s566 = scalar_lea.vmem %s177, 8 [#allocation2]
        %567 = vst [vmem:[%s566] sm:$0xff] %v564
        %s568 = sadd.s32 %s183, 1
        %s569 = smul.u32 %s568, 24
        %s570 = scalar_lea.vmem %s182, %s569
        %v571 = vld [vmem:[%s570] sm:$0xff]
        %v572 = vld [vmem:[%s570 + $0x8] sm:$0xff]
        %v573 = vld [vmem:[%s570 + $0x18] sm:$0xff]
        %v574 = vld [vmem:[%s570 + $0x20] sm:$0xff]
        %v575 = vld [vmem:[%s570 + $0x30] sm:$0xff]
        %v576 = vld [vmem:[%s570 + $0x38] sm:$0xff]
        %v577 = vld [vmem:[%s570 + $0x48] sm:$0xff]
        %v578 = vld [vmem:[%s570 + $0x50] sm:$0xff]
        %v579 = vld [vmem:[%s570 + $0x60] sm:$0xff]
        %v580 = vld [vmem:[%s570 + $0x68] sm:$0xff]
        %v581 = vld [vmem:[%s570 + $0x78] sm:$0xff]
        %v582 = vld [vmem:[%s570 + $0x80] sm:$0xff]
        %v583 = vld [vmem:[%s570 + $0x90] sm:$0xff]
        %v584 = vld [vmem:[%s570 + $0x98] sm:$0xff]
        %v585 = vld [vmem:[%s570 + $0xa8] sm:$0xff]
        %v586 = vld [vmem:[%s570 + $0xb0] sm:$0xff]
        %v587 = vld [vmem:[%s186] sm:$0xff]
        %v588 = vld [vmem:[%s186 + $0x8] sm:$0xff]
        %v589 = vld [vmem:[%s186 + $0x18] sm:$0xff]
        %v590 = vld [vmem:[%s186 + $0x20] sm:$0xff]
        %v591 = vld [vmem:[%s186 + $0x30] sm:$0xff]
        %v592 = vld [vmem:[%s186 + $0x38] sm:$0xff]
        %v593 = vld [vmem:[%s186 + $0x48] sm:$0xff]
        %v594 = vld [vmem:[%s186 + $0x50] sm:$0xff]
        %v595 = vld [vmem:[%s186 + $0x60] sm:$0xff]
        %v596 = vld [vmem:[%s186 + $0x68] sm:$0xff]
        %v597 = vld [vmem:[%s186 + $0x78] sm:$0xff]
        %v598 = vld [vmem:[%s186 + $0x80] sm:$0xff]
        %v599 = vld [vmem:[%s186 + $0x90] sm:$0xff]
        %v600 = vld [vmem:[%s186 + $0x98] sm:$0xff]
        %v601 = vld [vmem:[%s186 + $0xa8] sm:$0xff]
        %v602 = vld [vmem:[%s186 + $0xb0] sm:$0xff]
        %619 = vrot.lane.b32.xlu0 %v587, 4
        %v620 = vpop.permute.xlu0 %619
        %621 = vrot.lane.b32.xlu0 %v588, 4
        %v622 = vpop.permute.xlu0 %621
        %623 = vrot.lane.b32.xlu0 %v589, 4
        %v624 = vpop.permute.xlu0 %623
        %625 = vrot.lane.b32.xlu0 %v590, 4
        %v626 = vpop.permute.xlu0 %625
        %627 = vrot.lane.b32.xlu0 %v591, 4
        %v628 = vpop.permute.xlu0 %627
        %629 = vrot.lane.b32.xlu0 %v592, 4
        %v630 = vpop.permute.xlu0 %629
        %631 = vrot.lane.b32.xlu0 %v593, 4
        %v632 = vpop.permute.xlu0 %631
        %633 = vrot.lane.b32.xlu0 %v594, 4
        %v634 = vpop.permute.xlu0 %633
        %635 = vrot.lane.b32.xlu0 %v595, 4
        %v636 = vpop.permute.xlu0 %635
        %637 = vrot.lane.b32.xlu0 %v596, 4
        %v638 = vpop.permute.xlu0 %637
        %639 = vrot.lane.b32.xlu0 %v597, 4
        %v640 = vpop.permute.xlu0 %639
        %641 = vrot.lane.b32.xlu0 %v598, 4
        %v642 = vpop.permute.xlu0 %641
        %643 = vrot.lane.b32.xlu0 %v599, 4
        %v644 = vpop.permute.xlu0 %643
        %645 = vrot.lane.b32.xlu0 %v600, 4
        %v646 = vpop.permute.xlu0 %645
        %647 = vrot.lane.b32.xlu0 %v601, 4
        %v648 = vpop.permute.xlu0 %647
        %649 = vrot.lane.b32.xlu0 %v602, 4
        %v650 = vpop.permute.xlu0 %649
        %v667 = vsel %vm209, %v571, %v620
        %v668 = vsel %vm209, %v572, %v622
        %v669 = vsel %vm209, %v573, %v624
        %v670 = vsel %vm209, %v574, %v626
        %v671 = vsel %vm209, %v575, %v628
        %v672 = vsel %vm209, %v576, %v630
        %v673 = vsel %vm209, %v577, %v632
        %v674 = vsel %vm209, %v578, %v634
        %v675 = vsel %vm209, %v579, %v636
        %v676 = vsel %vm209, %v580, %v638
        %v677 = vsel %vm209, %v581, %v640
        %v678 = vsel %vm209, %v582, %v642
        %v679 = vsel %vm209, %v583, %v644
        %v680 = vsel %vm209, %v584, %v646
        %v681 = vsel %vm209, %v585, %v648
        %v682 = vsel %vm209, %v586, %v650
        %s683 = scalar_lea.vmem %s1, 16
        %v684 = vld [vmem:[%s683] sm:$0xff]
        %v686 = vsel %vm510, %v684, 0
        %v689 = vsel %vm510, %v667, 0
        %v692 = vsel %vm510, %v668, 0
        %v695 = vsel %vm510, %v669, 0
        %v698 = vsel %vm510, %v670, 0
        %v701 = vsel %vm510, %v671, 0
        %v704 = vsel %vm510, %v672, 0
        %v707 = vsel %vm510, %v673, 0
        %v710 = vsel %vm510, %v674, 0
        %v713 = vsel %vm510, %v675, 0
        %v716 = vsel %vm510, %v676, 0
        %v719 = vsel %vm510, %v677, 0
        %v722 = vsel %vm510, %v678, 0
        %v725 = vsel %vm510, %v679, 0
        %v728 = vsel %vm510, %v680, 0
        %v731 = vsel %vm510, %v681, 0
        %v734 = vsel %vm510, %v682, 0
        %736 = vmatpush.xpose.msra.mxu0 %v734
        %737 = vmatpush.xpose.msra.mxu0 %v731
        %738 = vmatpush.xpose.msra.mxu0 %v728
        %739 = vmatpush.xpose.msra.mxu0 %v725
        %740 = vmatpush.xpose.msra.mxu0 %v722
        %741 = vmatpush.xpose.msra.mxu0 %v719
        %742 = vmatpush.xpose.msra.mxu0 %v716
        %743 = vmatpush.xpose.msra.mxu0 %v713
        %744 = vmatpush.xpose.msra.mxu0 %v710
        %745 = vmatpush.xpose.msra.mxu0 %v707
        %746 = vmatpush.xpose.msra.mxu0 %v704
        %747 = vmatpush.xpose.msra.mxu0 %v701
        %748 = vmatpush.xpose.msra.mxu0 %v698
        %749 = vmatpush.xpose.msra.mxu0 %v695
        %750 = vmatpush.xpose.msra.mxu0 %v692
        %751 = vmatpush.xpose.msra.mxu0 %v689
        %752 = vmatmul.f32.gmra.mxu0 %v686
        %v753 = vpop.f32.mrf.mxu0
        %v754 = vadd.f32 %v207, %v753
        %755 = vdwg.mxu0
        %s756 = scalar_lea.vmem %s177, 16 [#allocation2]
        %757 = vst [vmem:[%s756] sm:$0xff] %v754
        %v758 = vld [vmem:[%s570] sm:$0xff]
        %v759 = vld [vmem:[%s570 + $0x8] sm:$0xff]
        %v760 = vld [vmem:[%s570 + $0x10] sm:$0x1]
        %v761 = vld [vmem:[%s570 + $0x18] sm:$0xff]
        %v762 = vld [vmem:[%s570 + $0x20] sm:$0xff]
        %v763 = vld [vmem:[%s570 + $0x28] sm:$0x1]
        %v764 = vld [vmem:[%s570 + $0x30] sm:$0xff]
        %v765 = vld [vmem:[%s570 + $0x38] sm:$0xff]
        %v766 = vld [vmem:[%s570 + $0x40] sm:$0x1]
        %v767 = vld [vmem:[%s570 + $0x48] sm:$0xff]
        %v768 = vld [vmem:[%s570 + $0x50] sm:$0xff]
        %v769 = vld [vmem:[%s570 + $0x58] sm:$0x1]
        %v770 = vld [vmem:[%s570 + $0x60] sm:$0xff]
        %v771 = vld [vmem:[%s570 + $0x68] sm:$0xff]
        %v772 = vld [vmem:[%s570 + $0x70] sm:$0x1]
        %v773 = vld [vmem:[%s570 + $0x78] sm:$0xff]
        %v774 = vld [vmem:[%s570 + $0x80] sm:$0xff]
        %v775 = vld [vmem:[%s570 + $0x88] sm:$0x1]
        %v776 = vld [vmem:[%s570 + $0x90] sm:$0xff]
        %v777 = vld [vmem:[%s570 + $0x98] sm:$0xff]
        %v778 = vld [vmem:[%s570 + $0xa0] sm:$0x1]
        %v779 = vld [vmem:[%s570 + $0xa8] sm:$0xff]
        %v780 = vld [vmem:[%s570 + $0xb0] sm:$0xff]
        %v781 = vld [vmem:[%s570 + $0xb8] sm:$0x1]
        %v782 = vld [vmem:[%s186] sm:$0xff]
        %v783 = vld [vmem:[%s186 + $0x8] sm:$0xff]
        %v784 = vld [vmem:[%s186 + $0x10] sm:$0x1]
        %v785 = vld [vmem:[%s186 + $0x18] sm:$0xff]
        %v786 = vld [vmem:[%s186 + $0x20] sm:$0xff]
        %v787 = vld [vmem:[%s186 + $0x28] sm:$0x1]
        %v788 = vld [vmem:[%s186 + $0x30] sm:$0xff]
        %v789 = vld [vmem:[%s186 + $0x38] sm:$0xff]
        %v790 = vld [vmem:[%s186 + $0x40] sm:$0x1]
        %v791 = vld [vmem:[%s186 + $0x48] sm:$0xff]
        %v792 = vld [vmem:[%s186 + $0x50] sm:$0xff]
        %v793 = vld [vmem:[%s186 + $0x58] sm:$0x1]
        %v794 = vld [vmem:[%s186 + $0x60] sm:$0xff]
        %v795 = vld [vmem:[%s186 + $0x68] sm:$0xff]
        %v796 = vld [vmem:[%s186 + $0x70] sm:$0x1]
        %v797 = vld [vmem:[%s186 + $0x78] sm:$0xff]
        %v798 = vld [vmem:[%s186 + $0x80] sm:$0xff]
        %v799 = vld [vmem:[%s186 + $0x88] sm:$0x1]
        %v800 = vld [vmem:[%s186 + $0x90] sm:$0xff]
        %v801 = vld [vmem:[%s186 + $0x98] sm:$0xff]
        %v802 = vld [vmem:[%s186 + $0xa0] sm:$0x1]
        %v803 = vld [vmem:[%s186 + $0xa8] sm:$0xff]
        %v804 = vld [vmem:[%s186 + $0xb0] sm:$0xff]
        %v805 = vld [vmem:[%s186 + $0xb8] sm:$0x1]
        %v822 = vrot.slane %v758, 7
        %v823 = vrot.slane %v759, 7
        %v824 = vsel %vm322, %v822, %v823
        %v825 = vrot.slane %v761, 7
        %v826 = vrot.slane %v762, 7
        %v827 = vsel %vm322, %v825, %v826
        %v828 = vrot.slane %v764, 7
        %v829 = vrot.slane %v765, 7
        %v830 = vsel %vm322, %v828, %v829
        %v831 = vrot.slane %v767, 7
        %v832 = vrot.slane %v768, 7
        %v833 = vsel %vm322, %v831, %v832
        %v834 = vrot.slane %v770, 7
        %v835 = vrot.slane %v771, 7
        %v836 = vsel %vm322, %v834, %v835
        %v837 = vrot.slane %v773, 7
        %v838 = vrot.slane %v774, 7
        %v839 = vsel %vm322, %v837, %v838
        %v840 = vrot.slane %v776, 7
        %v841 = vrot.slane %v777, 7
        %v842 = vsel %vm322, %v840, %v841
        %v843 = vrot.slane %v779, 7
        %v844 = vrot.slane %v780, 7
        %v845 = vsel %vm322, %v843, %v844
        %846 = vrot.lane.b32.xlu0 %v822, 4
        %v847 = vpop.permute.xlu0 %846
        %848 = vrot.lane.b32.xlu0 %v824, 4
        %v849 = vpop.permute.xlu0 %848
        %850 = vrot.lane.b32.xlu0 %v823, 4
        %v851 = vpop.permute.xlu0 %850
        %852 = vrot.lane.b32.xlu0 %v825, 4
        %v853 = vpop.permute.xlu0 %852
        %854 = vrot.lane.b32.xlu0 %v827, 4
        %v855 = vpop.permute.xlu0 %854
        %856 = vrot.lane.b32.xlu0 %v826, 4
        %v857 = vpop.permute.xlu0 %856
        %858 = vrot.lane.b32.xlu0 %v828, 4
        %v859 = vpop.permute.xlu0 %858
        %860 = vrot.lane.b32.xlu0 %v830, 4
        %v861 = vpop.permute.xlu0 %860
        %862 = vrot.lane.b32.xlu0 %v829, 4
        %v863 = vpop.permute.xlu0 %862
        %864 = vrot.lane.b32.xlu0 %v831, 4
        %v865 = vpop.permute.xlu0 %864
        %866 = vrot.lane.b32.xlu0 %v833, 4
        %v867 = vpop.permute.xlu0 %866
        %868 = vrot.lane.b32.xlu0 %v832, 4
        %v869 = vpop.permute.xlu0 %868
        %870 = vrot.lane.b32.xlu0 %v834, 4
        %v871 = vpop.permute.xlu0 %870
        %872 = vrot.lane.b32.xlu0 %v836, 4
        %v873 = vpop.permute.xlu0 %872
        %874 = vrot.lane.b32.xlu0 %v835, 4
        %v875 = vpop.permute.xlu0 %874
        %876 = vrot.lane.b32.xlu0 %v837, 4
        %v877 = vpop.permute.xlu0 %876
        %878 = vrot.lane.b32.xlu0 %v839, 4
        %v879 = vpop.permute.xlu0 %878
        %880 = vrot.lane.b32.xlu0 %v838, 4
        %v881 = vpop.permute.xlu0 %880
        %882 = vrot.lane.b32.xlu0 %v840, 4
        %v883 = vpop.permute.xlu0 %882
        %884 = vrot.lane.b32.xlu0 %v842, 4
        %v885 = vpop.permute.xlu0 %884
        %886 = vrot.lane.b32.xlu0 %v841, 4
        %v887 = vpop.permute.xlu0 %886
        %888 = vrot.lane.b32.xlu0 %v843, 4
        %v889 = vpop.permute.xlu0 %888
        %890 = vrot.lane.b32.xlu0 %v845, 4
        %v891 = vpop.permute.xlu0 %890
        %892 = vrot.lane.b32.xlu0 %v844, 4
        %v893 = vpop.permute.xlu0 %892
        %942 = vrot.lane.b32.xlu0 %v782, 8
        %v943 = vpop.permute.xlu0 %942
        %944 = vrot.lane.b32.xlu0 %v783, 8
        %v945 = vpop.permute.xlu0 %944
        %946 = vrot.lane.b32.xlu0 %v784, 8
        %v947 = vpop.permute.xlu0 %946
        %948 = vrot.lane.b32.xlu0 %v785, 8
        %v949 = vpop.permute.xlu0 %948
        %950 = vrot.lane.b32.xlu0 %v786, 8
        %v951 = vpop.permute.xlu0 %950
        %952 = vrot.lane.b32.xlu0 %v787, 8
        %v953 = vpop.permute.xlu0 %952
        %954 = vrot.lane.b32.xlu0 %v788, 8
        %v955 = vpop.permute.xlu0 %954
        %956 = vrot.lane.b32.xlu0 %v789, 8
        %v957 = vpop.permute.xlu0 %956
        %958 = vrot.lane.b32.xlu0 %v790, 8
        %v959 = vpop.permute.xlu0 %958
        %960 = vrot.lane.b32.xlu0 %v791, 8
        %v961 = vpop.permute.xlu0 %960
        %962 = vrot.lane.b32.xlu0 %v792, 8
        %v963 = vpop.permute.xlu0 %962
        %964 = vrot.lane.b32.xlu0 %v793, 8
        %v965 = vpop.permute.xlu0 %964
        %966 = vrot.lane.b32.xlu0 %v794, 8
        %v967 = vpop.permute.xlu0 %966
        %968 = vrot.lane.b32.xlu0 %v795, 8
        %v969 = vpop.permute.xlu0 %968
        %970 = vrot.lane.b32.xlu0 %v796, 8
        %v971 = vpop.permute.xlu0 %970
        %972 = vrot.lane.b32.xlu0 %v797, 8
        %v973 = vpop.permute.xlu0 %972
        %974 = vrot.lane.b32.xlu0 %v798, 8
        %v975 = vpop.permute.xlu0 %974
        %976 = vrot.lane.b32.xlu0 %v799, 8
        %v977 = vpop.permute.xlu0 %976
        %978 = vrot.lane.b32.xlu0 %v800, 8
        %v979 = vpop.permute.xlu0 %978
        %980 = vrot.lane.b32.xlu0 %v801, 8
        %v981 = vpop.permute.xlu0 %980
        %982 = vrot.lane.b32.xlu0 %v802, 8
        %v983 = vpop.permute.xlu0 %982
        %984 = vrot.lane.b32.xlu0 %v803, 8
        %v985 = vpop.permute.xlu0 %984
        %986 = vrot.lane.b32.xlu0 %v804, 8
        %v987 = vpop.permute.xlu0 %986
        %988 = vrot.lane.b32.xlu0 %v805, 8
        %v989 = vpop.permute.xlu0 %988
        %v1014 = vrot.slane %v782, 7
        %v1015 = vrot.slane %v783, 7
        %v1016 = vsel %vm322, %v1014, %v1015
        %v1017 = vrot.slane %v785, 7
        %v1018 = vrot.slane %v786, 7
        %v1019 = vsel %vm322, %v1017, %v1018
        %v1020 = vrot.slane %v788, 7
        %v1021 = vrot.slane %v789, 7
        %v1022 = vsel %vm322, %v1020, %v1021
        %v1023 = vrot.slane %v791, 7
        %v1024 = vrot.slane %v792, 7
        %v1025 = vsel %vm322, %v1023, %v1024
        %v1026 = vrot.slane %v794, 7
        %v1027 = vrot.slane %v795, 7
        %v1028 = vsel %vm322, %v1026, %v1027
        %v1029 = vrot.slane %v797, 7
        %v1030 = vrot.slane %v798, 7
        %v1031 = vsel %vm322, %v1029, %v1030
        %v1032 = vrot.slane %v800, 7
        %v1033 = vrot.slane %v801, 7
        %v1034 = vsel %vm322, %v1032, %v1033
        %v1035 = vrot.slane %v803, 7
        %v1036 = vrot.slane %v804, 7
        %v1037 = vsel %vm322, %v1035, %v1036
        %1038 = vrot.lane.b32.xlu0 %v1014, 12
        %v1039 = vpop.permute.xlu0 %1038
        %1040 = vrot.lane.b32.xlu0 %v1016, 12
        %v1041 = vpop.permute.xlu0 %1040
        %1042 = vrot.lane.b32.xlu0 %v1015, 12
        %v1043 = vpop.permute.xlu0 %1042
        %1044 = vrot.lane.b32.xlu0 %v1017, 12
        %v1045 = vpop.permute.xlu0 %1044
        %1046 = vrot.lane.b32.xlu0 %v1019, 12
        %v1047 = vpop.permute.xlu0 %1046
        %1048 = vrot.lane.b32.xlu0 %v1018, 12
        %v1049 = vpop.permute.xlu0 %1048
        %1050 = vrot.lane.b32.xlu0 %v1020, 12
        %v1051 = vpop.permute.xlu0 %1050
        %1052 = vrot.lane.b32.xlu0 %v1022, 12
        %v1053 = vpop.permute.xlu0 %1052
        %1054 = vrot.lane.b32.xlu0 %v1021, 12
        %v1055 = vpop.permute.xlu0 %1054
        %1056 = vrot.lane.b32.xlu0 %v1023, 12
        %v1057 = vpop.permute.xlu0 %1056
        %1058 = vrot.lane.b32.xlu0 %v1025, 12
        %v1059 = vpop.permute.xlu0 %1058
        %1060 = vrot.lane.b32.xlu0 %v1024, 12
        %v1061 = vpop.permute.xlu0 %1060
        %1062 = vrot.lane.b32.xlu0 %v1026, 12
        %v1063 = vpop.permute.xlu0 %1062
        %1064 = vrot.lane.b32.xlu0 %v1028, 12
        %v1065 = vpop.permute.xlu0 %1064
        %1066 = vrot.lane.b32.xlu0 %v1027, 12
        %v1067 = vpop.permute.xlu0 %1066
        %1068 = vrot.lane.b32.xlu0 %v1029, 12
        %v1069 = vpop.permute.xlu0 %1068
        %1070 = vrot.lane.b32.xlu0 %v1031, 12
        %v1071 = vpop.permute.xlu0 %1070
        %1072 = vrot.lane.b32.xlu0 %v1030, 12
        %v1073 = vpop.permute.xlu0 %1072
        %1074 = vrot.lane.b32.xlu0 %v1032, 12
        %v1075 = vpop.permute.xlu0 %1074
        %1076 = vrot.lane.b32.xlu0 %v1034, 12
        %v1077 = vpop.permute.xlu0 %1076
        %1078 = vrot.lane.b32.xlu0 %v1033, 12
        %v1079 = vpop.permute.xlu0 %1078
        %1080 = vrot.lane.b32.xlu0 %v1035, 12
        %v1081 = vpop.permute.xlu0 %1080
        %1082 = vrot.lane.b32.xlu0 %v1037, 12
        %v1083 = vpop.permute.xlu0 %1082
        %1084 = vrot.lane.b32.xlu0 %v1036, 12
        %v1085 = vpop.permute.xlu0 %1084
        %v1110 = vsel %vm209, %v758, %v847
        %v1111 = vsel %vm209, %v759, %v849
        %v1112 = vsel %vm209, %v760, %v851
        %v1113 = vsel %vm209, %v761, %v853
        %v1114 = vsel %vm209, %v762, %v855
        %v1115 = vsel %vm209, %v763, %v857
        %v1116 = vsel %vm209, %v764, %v859
        %v1117 = vsel %vm209, %v765, %v861
        %v1118 = vsel %vm209, %v766, %v863
        %v1119 = vsel %vm209, %v767, %v865
        %v1120 = vsel %vm209, %v768, %v867
        %v1121 = vsel %vm209, %v769, %v869
        %v1122 = vsel %vm209, %v770, %v871
        %v1123 = vsel %vm209, %v771, %v873
        %v1124 = vsel %vm209, %v772, %v875
        %v1125 = vsel %vm209, %v773, %v877
        %v1126 = vsel %vm209, %v774, %v879
        %v1127 = vsel %vm209, %v775, %v881
        %v1128 = vsel %vm209, %v776, %v883
        %v1129 = vsel %vm209, %v777, %v885
        %v1130 = vsel %vm209, %v778, %v887
        %v1131 = vsel %vm209, %v779, %v889
        %v1132 = vsel %vm209, %v780, %v891
        %v1133 = vsel %vm209, %v781, %v893
        %v1134 = vsel %vm510, %v1110, %v943
        %v1135 = vsel %vm510, %v1111, %v945
        %v1136 = vsel %vm510, %v1112, %v947
        %v1137 = vsel %vm510, %v1113, %v949
        %v1138 = vsel %vm510, %v1114, %v951
        %v1139 = vsel %vm510, %v1115, %v953
        %v1140 = vsel %vm510, %v1116, %v955
        %v1141 = vsel %vm510, %v1117, %v957
        %v1142 = vsel %vm510, %v1118, %v959
        %v1143 = vsel %vm510, %v1119, %v961
        %v1144 = vsel %vm510, %v1120, %v963
        %v1145 = vsel %vm510, %v1121, %v965
        %v1146 = vsel %vm510, %v1122, %v967
        %v1147 = vsel %vm510, %v1123, %v969
        %v1148 = vsel %vm510, %v1124, %v971
        %v1149 = vsel %vm510, %v1125, %v973
        %v1150 = vsel %vm510, %v1126, %v975
        %v1151 = vsel %vm510, %v1127, %v977
        %v1152 = vsel %vm510, %v1128, %v979
        %v1153 = vsel %vm510, %v1129, %v981
        %v1154 = vsel %vm510, %v1130, %v983
        %v1155 = vsel %vm510, %v1131, %v985
        %v1156 = vsel %vm510, %v1132, %v987
        %v1157 = vsel %vm510, %v1133, %v989
        %vm1158 = vcmask 97280
        %v1159 = vsel %vm1158, %v1134, %v1039
        %v1160 = vsel %vm1158, %v1135, %v1041
        %v1161 = vsel %vm1158, %v1136, %v1043
        %v1162 = vsel %vm1158, %v1137, %v1045
        %v1163 = vsel %vm1158, %v1138, %v1047
        %v1164 = vsel %vm1158, %v1139, %v1049
        %v1165 = vsel %vm1158, %v1140, %v1051
        %v1166 = vsel %vm1158, %v1141, %v1053
        %v1167 = vsel %vm1158, %v1142, %v1055
        %v1168 = vsel %vm1158, %v1143, %v1057
        %v1169 = vsel %vm1158, %v1144, %v1059
        %v1170 = vsel %vm1158, %v1145, %v1061
        %v1171 = vsel %vm1158, %v1146, %v1063
        %v1172 = vsel %vm1158, %v1147, %v1065
        %v1173 = vsel %vm1158, %v1148, %v1067
        %v1174 = vsel %vm1158, %v1149, %v1069
        %v1175 = vsel %vm1158, %v1150, %v1071
        %v1176 = vsel %vm1158, %v1151, %v1073
        %v1177 = vsel %vm1158, %v1152, %v1075
        %v1178 = vsel %vm1158, %v1153, %v1077
        %v1179 = vsel %vm1158, %v1154, %v1079
        %v1180 = vsel %vm1158, %v1155, %v1081
        %v1181 = vsel %vm1158, %v1156, %v1083
        %v1182 = vsel %vm1158, %v1157, %v1085
        %v1207 = vrot.slane %v1159, 1
        %v1208 = vrot.slane %v1160, 1
        %v1209 = vsel %vm467, %v1207, %v1208
        %v1210 = vrot.slane %v1161, 1
        %v1211 = vsel %vm467, %v1208, %v1210
        %v1212 = vrot.slane %v1162, 1
        %v1213 = vrot.slane %v1163, 1
        %v1214 = vsel %vm467, %v1212, %v1213
        %v1215 = vrot.slane %v1164, 1
        %v1216 = vsel %vm467, %v1213, %v1215
        %v1217 = vrot.slane %v1165, 1
        %v1218 = vrot.slane %v1166, 1
        %v1219 = vsel %vm467, %v1217, %v1218
        %v1220 = vrot.slane %v1167, 1
        %v1221 = vsel %vm467, %v1218, %v1220
        %v1222 = vrot.slane %v1168, 1
        %v1223 = vrot.slane %v1169, 1
        %v1224 = vsel %vm467, %v1222, %v1223
        %v1225 = vrot.slane %v1170, 1
        %v1226 = vsel %vm467, %v1223, %v1225
        %v1227 = vrot.slane %v1171, 1
        %v1228 = vrot.slane %v1172, 1
        %v1229 = vsel %vm467, %v1227, %v1228
        %v1230 = vrot.slane %v1173, 1
        %v1231 = vsel %vm467, %v1228, %v1230
        %v1232 = vrot.slane %v1174, 1
        %v1233 = vrot.slane %v1175, 1
        %v1234 = vsel %vm467, %v1232, %v1233
        %v1235 = vrot.slane %v1176, 1
        %v1236 = vsel %vm467, %v1233, %v1235
        %v1237 = vrot.slane %v1177, 1
        %v1238 = vrot.slane %v1178, 1
        %v1239 = vsel %vm467, %v1237, %v1238
        %v1240 = vrot.slane %v1179, 1
        %v1241 = vsel %vm467, %v1238, %v1240
        %v1242 = vrot.slane %v1180, 1
        %v1243 = vrot.slane %v1181, 1
        %v1244 = vsel %vm467, %v1242, %v1243
        %v1245 = vrot.slane %v1182, 1
        %v1246 = vsel %vm467, %v1243, %v1245
        %s1247 = scalar_lea.vmem %s1, 24
        %v1248 = vld [vmem:[%s1247] sm:$0xff]
        %vm1249 = vcmask 130048
        %v1251 = vsel %vm1249, %v1248, 0
        %v1253 = vsel %vm1249, %v1209, 0
        %v1255 = vsel %vm1249, %v1211, 0
        %v1257 = vsel %vm1249, %v1214, 0
        %v1259 = vsel %vm1249, %v1216, 0
        %v1261 = vsel %vm1249, %v1219, 0
        %v1263 = vsel %vm1249, %v1221, 0
        %v1265 = vsel %vm1249, %v1224, 0
        %v1267 = vsel %vm1249, %v1226, 0
        %v1269 = vsel %vm1249, %v1229, 0
        %v1271 = vsel %vm1249, %v1231, 0
        %v1273 = vsel %vm1249, %v1234, 0
        %v1275 = vsel %vm1249, %v1236, 0
        %v1277 = vsel %vm1249, %v1239, 0
        %v1279 = vsel %vm1249, %v1241, 0
        %v1281 = vsel %vm1249, %v1244, 0
        %v1283 = vsel %vm1249, %v1246, 0
        %1285 = vmatpush.xpose.msra.mxu0 %v1283
        %1286 = vmatpush.xpose.msra.mxu0 %v1281
        %1287 = vmatpush.xpose.msra.mxu0 %v1279
        %1288 = vmatpush.xpose.msra.mxu0 %v1277
        %1289 = vmatpush.xpose.msra.mxu0 %v1275
        %1290 = vmatpush.xpose.msra.mxu0 %v1273
        %1291 = vmatpush.xpose.msra.mxu0 %v1271
        %1292 = vmatpush.xpose.msra.mxu0 %v1269
        %1293 = vmatpush.xpose.msra.mxu0 %v1267
        %1294 = vmatpush.xpose.msra.mxu0 %v1265
        %1295 = vmatpush.xpose.msra.mxu0 %v1263
        %1296 = vmatpush.xpose.msra.mxu0 %v1261
        %1297 = vmatpush.xpose.msra.mxu0 %v1259
        %1298 = vmatpush.xpose.msra.mxu0 %v1257
        %1299 = vmatpush.xpose.msra.mxu0 %v1255
        %1300 = vmatpush.xpose.msra.mxu0 %v1253
        %1301 = vmatmul.f32.gmra.mxu0 %v1251
        %v1302 = vpop.f32.mrf.mxu0
        %v1303 = vadd.f32 %v207, %v1302
        %1304 = vdwg.mxu0
        %s1305 = scalar_lea.vmem %s177, 24 [#allocation2]
        %1306 = vst [vmem:[%s1305] sm:$0xff] %v1303
        %s1307 = sand.u32 %s107, 1
        %s1308 = scalar_lea.sflag [#allocation3], %s1307
        %s1309 = sand.u32 %s107, 1
        %s1310 = smul.addr %s1309, 32
        %s1311 = scalar_lea.vmem [#allocation2], %s1310
        // Predicated region
        $region33: #{tpu_custom_call.1} parent=31 // pred_check
          %p1312 = pneg %p117
        $region34: #{tpu_custom_call.1} parent=31 // pred_check_branch
          %1314 = sbr.rel (%p1312) target = $region36
        $region35: #{tpu_custom_call.1} parent=31 // pred_region
          %1316 = vsyncadd %s1308, 0
          %s1317 = smul.addr %s21, 8
          %s1318 = sadd.s32 %s22, %s1317
          %s1319 = smul.addr %s1318, 8
          %s1320 = scalar_lea.hbm %s3, %s1319
          %s1321 = sshll.u32 %s1311, 4
          %s1322 = int_to_ptr.vmem [resolvable:$true] %s1321
          %s1323 = sshll.u32 %s1320, 4
          %s1324 = int_to_ptr.hbm [resolvable:$true] %s1323
          %1329 = dma.vmem_to_hbm [thread:$0]  %s1322, 512, %s1324, %s1308, 128, 256, 8
        $region36: #{tpu_custom_call.1} parent=31 // pred_fallthru
          _
      $region32: #{tpu_custom_call.1} parent=5 // pred_fallthru
        _
      %p1330 = scmp.le.s32.totalorder 2, %s12
      // Predicated region
      $region37: #{tpu_custom_call.1} parent=5 // pred_check
        %p1331 = pneg %p1330
      $region38: #{tpu_custom_call.1} parent=5 // pred_check_branch
        %1333 = sbr.rel (%p1331) target = $region40
      $region39: #{tpu_custom_call.1} parent=5 // pred_region
        %s1334 = ssub.s32 %s12, 2
        // Predicated region
        $region41: #{tpu_custom_call.1} parent=39 // pred_check
          %p1335 = pneg %p123
        $region42: #{tpu_custom_call.1} parent=39 // pred_check_branch
          %1337 = sbr.rel (%p1335) target = $region44
        $region43: #{tpu_custom_call.1} parent=39 // pred_region
          %s1338 = sand.u32 %s108, 1
          %s1339 = scalar_lea.sflag [#allocation3], %s1338
          %s1340 = sand.u32 %s108, 1
          %s1341 = smul.addr %s1340, 32
          %s1342 = scalar_lea.vmem [#allocation2], %s1341
          %1344 = dma.done %s1339, 512
        $region44: #{tpu_custom_call.1} parent=39 // pred_fallthru
          _
      $region40: #{tpu_custom_call.1} parent=5 // pred_fallthru
        _
    $region6: #{tpu_custom_call.1} parent=1 // loop_footer
      %s16 = sadd.s32 1, %s12
    $region7: #{tpu_custom_call.1} parent=1 // loop_footer_branch
      %11 = sbr.rel target = $region3
    $region8: #{tpu_custom_call.1} parent=1 // loop_exit
      _
    %1345 = vsyncpa [#allocation3], 1
    %s1346 = scalar_lea.sflag [#allocation3], 1
    %1347 = vsyncpa %s1346, 1

</llo_original>
